<compile_context>
chip_gen: v7x
topology: tpu7x:2x2x1
jax: 0.10.0
libtpu: 0.0.40
codegen_flags: <defaults>
</compile_context>

<pallas_src>
import jax
import jax.numpy as jnp
from jax.experimental import pallas as pl
from jax.experimental.pallas import tpu as pltpu


def _drop_path_kernel(x_ref, mask_ref, o_ref):
    # x_ref:    (tn, tf) flattened-feature tile
    # mask_ref: (tn, 1)  per-sample keep mask in f32, pre-scaled to {0, 1/keep_prob}
    # o_ref:    (tn, tf)
    # Multiply in f32 (mask is f32 -> product promotes), cast once on store.
    o_ref[...] = (x_ref[...] * mask_ref[...]).astype(o_ref.dtype)


def _tpu_generation():
    """Best-effort TPU generation detection (5 / 6 / 7)."""
    try:
        kind = jax.devices()[0].device_kind.lower()
    except Exception:  # pragma: no cover - defensive
        return 6
    if "v7" in kind:
        return 7
    if "v6" in kind:
        return 6
    if "v5" in kind:
        return 5
    return 6


def _choose_tiles(n, f, dtype, gen):
    """Pick (tn, tf) obeying the (8,128) block rule, sized per generation/dtype.

    The (8,128) rule applies to block_shape, not to whether the grid divides
    the array, so fixed aligned tiles + pl.cdiv grids with partial trailing
    blocks are always legal. Full extent is used only when a dim is smaller
    than the cap / minimum tile.
    """
    itemsize = jnp.dtype(dtype).itemsize

    # Per-array block byte budget by generation (x block == out block).
    if gen >= 7:
        blk_bytes = 8 << 20    # ~32 MiB double-buffered working set
    elif gen == 6:
        blk_bytes = 4 << 20    # ~16 MiB double-buffered, fits 32 MiB default
    else:
        blk_bytes = 2 << 20    # ~8 MiB double-buffered, fits 16 MiB default

    # --- N (sublane) tile ---
    tn_cap = 512 if gen >= 6 else 256   # multiples of 32 -> legal for any dtype
    if n <= tn_cap:
        tn = n                 # full extent along N is always legal
    else:
        tn = tn_cap            # aligned block; trailing partial block is fine

    # --- F (lane) tile ---
    if f <= 128:
        tf = f                 # full extent (tiny features; padded path avoids this)
    else:
        budget = max(128, (blk_bytes // max(tn * itemsize, 1)) // 128 * 128)
        f_aligned = max(128, (f // 128) * 128)
        tf = min(budget, f_aligned)

    # --- v7x: make sure both TensorCores get work (>= 2 parallel blocks) ---
    if gen >= 7:
        grid_blocks = -(-n // tn) * -(-f // tf)
        if grid_blocks < 2:
            if f >= 256:
                tf = max(128, (((f + 1) // 2) // 128) * 128)
            elif n >= 16:
                tn = max(8, ((n // 2) // 8) * 8)
            # else: input is tiny; leave a (1,1) grid.

    return tn, tf, blk_bytes


def drop_path_forward(x, drop_prob=0.0, training=False, *, rng_key=None):
    """Pallas implementation of DropPath.drop_path / forward."""
    if drop_prob == 0.0 or not training:
        return x

    keep_prob = 1.0 - drop_prob
    n = x.shape[0]
    flat = x.reshape(n, -1)
    f = flat.shape[1]

    if rng_key is None:
        # TODO(synk): callers should pass a fresh key per training step; the
        # fixed default is for the deterministic demo only.
        rng_key = jax.random.PRNGKey(0)

    # Per-sample Bernoulli(keep_prob) mask in float32 with 1/keep_prob folded
    # in; kept in f32 so low-precision x dtypes don't round the scale factor.
    u = jax.random.uniform(rng_key, (n, 1), dtype=jnp.float32)
    mask = jnp.floor(keep_prob + u) * jnp.float32(1.0 / keep_prob)

    # Pad small / ragged feature extents up to a multiple of 128 so the output
    # last dim presented to the kernel is lane-dense (unmasked vst). Padding is
    # only worth the extra copy for small F; large ragged F uses partial
    # trailing blocks instead.
    f_pad = f
    if f % 128 != 0 and f < 1024:
        f_pad = ((f + 127) // 128) * 128
        flat = jnp.pad(flat, ((0, 0), (0, f_pad - f)))

    gen = _tpu_generation()
    tn, tf, blk_bytes = _choose_tiles(n, f_pad, x.dtype, gen)
    grid = (pl.cdiv(n, tn), pl.cdiv(f_pad, tf))

    # Scoped-VMEM limit: generous on v7x (64 MiB physical), default elsewhere.
    if gen >= 7:
        vmem_limit = 48 << 20
    elif gen == 6:
        vmem_limit = 32 << 20
    else:
        vmem_limit = None

    compiler_params = pltpu.CompilerParams(
        dimension_semantics=("parallel", "parallel"),
        vmem_limit_bytes=vmem_limit,
    )

    # Note: pass input_output_aliases={0: 0} here if the caller can donate the
    # flattened activation buffer (halves HBM footprint, same traffic).
    out_flat = pl.pallas_call(
        _drop_path_kernel,
        out_shape=jax.ShapeDtypeStruct((n, f_pad), x.dtype),
        grid_spec=pl.GridSpec(
            grid=grid,
            in_specs=[
                pl.BlockSpec((tn, tf), lambda i, j: (i, j)),
                # Mask block index is constant across the inner F loop, so the
                # tiny mask tile stays resident and is re-DMA'd only N/tn times.
                pl.BlockSpec((tn, 1), lambda i, j: (i, 0)),
            ],
            out_specs=pl.BlockSpec((tn, tf), lambda i, j: (i, j)),
        ),
        compiler_params=compiler_params,
    )(flat, mask)

    if f_pad != f:
        out_flat = out_flat[:, :f]
    return out_flat.reshape(x.shape)


class DropPath:
    """Mirror of the PyTorch module (forward uses training=False default)."""

    def __init__(self, drop_prob=0.0):
        self.drop_prob = drop_prob

    def __call__(self, x, training=False, rng_key=None):
        # PyTorch forward calls drop_path(x, drop_prob) with training=False
        # (identity); training=True exercises the Pallas kernel.
        return drop_path_forward(x, self.drop_prob, training, rng_key=rng_key)


if __name__ == "__main__":
    key = jax.random.PRNGKey(0)
    kx, kmask = jax.random.split(key)

    # Small NCHW input consistent with a vision feature map.
    x = jax.random.normal(kx, (2, 4, 16, 16), dtype=jnp.float32)

    module = DropPath(drop_prob=0.2)

    # 1) Forward exactly as the PyTorch module (training=False) -> identity.
    y_eval = module(x)
    y_eval = jax.block_until_ready(y_eval)
    assert jnp.allclose(y_eval, x), "eval-mode DropPath must be identity"

    # 2) Training-mode path: exercises the Pallas kernel.
    y_train = module(x, training=True, rng_key=kmask)
    y_train = jax.block_until_ready(y_train)

    # Reference: same mask construction as the wrapper, applied with plain JAX.
    keep_prob = 1.0 - module.drop_prob
    u = jax.random.uniform(kmask, (x.shape[0], 1), dtype=jnp.float32)
    mask_scaled = jnp.floor(keep_prob + u) * jnp.float32(1.0 / keep_prob)
    y_ref = (x * mask_scaled.reshape(x.shape[0], 1, 1, 1)).astype(x.dtype)
    assert jnp.allclose(y_train, y_ref, atol=1e-6), "kernel mismatch vs reference"

    # Semantic property: every sample row is either all-zero or x / keep_prob.
    flat_out = y_train.reshape(x.shape[0], -1)
    flat_in = x.reshape(x.shape[0], -1)
    for b in range(x.shape[0]):
        row_zero = bool(jnp.all(flat_out[b] == 0))
        row_scaled = bool(jnp.allclose(flat_out[b], flat_in[b] / keep_prob, atol=1e-6))
        assert row_zero or row_scaled, "row must be dropped or scaled by 1/keep_prob"

    print("KERNEL_OK")
</pallas_src>

<mosaic_0001>
module attributes {stable_mosaic.version = 11 : i64} {
  func.func @_drop_path_kernel(%arg0: i32, %arg1: i32, %arg2: memref<2x1024xf32, #tpu.memory_space<vmem>>, %arg3: memref<2x1xf32, #tpu.memory_space<vmem>>, %arg4: memref<2x1024xf32, #tpu.memory_space<vmem>>) attributes {dimension_semantics = [#tpu.dimension_semantics<parallel>, #tpu.dimension_semantics<parallel>], iteration_bounds = array<i64: 1, 1>, scalar_prefetch = 0 : i64, scratch_operands = 0 : i64, tpu.core_type = #tpu.core_type<tc>, window_params = [{transform_indices = @transform_0, window_bounds = array<i64: 2, 1024>}, {transform_indices = @transform_1, window_bounds = array<i64: 2, 1>}, {transform_indices = @transform_2, window_bounds = array<i64: 2, 1024>}]} {
    %c0 = arith.constant 0 : index
    %c0_0 = arith.constant 0 : index
    %0 = vector.load %arg2[%c0, %c0_0] : memref<2x1024xf32, #tpu.memory_space<vmem>>, vector<2x1024xf32>
    %c0_1 = arith.constant 0 : index
    %c0_2 = arith.constant 0 : index
    %1 = vector.load %arg3[%c0_1, %c0_2] : memref<2x1xf32, #tpu.memory_space<vmem>>, vector<2x1xf32>
    %2 = vector.broadcast %1 : vector<2x1xf32> to vector<2x1024xf32>
    %3 = arith.mulf %0, %2 : vector<2x1024xf32>
    %c0_3 = arith.constant 0 : index
    %c0_4 = arith.constant 0 : index
    %4 = vector.load %arg4[%c0_3, %c0_4] : memref<2x1024xf32, #tpu.memory_space<vmem>>, vector<2x1024xf32>
    tpu.vector_store %arg4[%c0_3, %c0_4], %3 {strides = array<i32>} : memref<2x1024xf32, #tpu.memory_space<vmem>>, vector<2x1024xf32>,
    return
  }
  func.func @transform_0(%arg0: i32, %arg1: i32) -> (i32, i32) {
    %c0_i32 = arith.constant 0 : i32
    return %arg0, %arg1 : i32, i32
  }
  func.func @transform_1(%arg0: i32, %arg1: i32) -> (i32, i32) {
    %c0_i32 = arith.constant 0 : i32
    %c0_i32_0 = arith.constant 0 : i32
    return %arg0, %c0_i32 : i32, i32
  }
  func.func @transform_2(%arg0: i32, %arg1: i32) -> (i32, i32) {
    %c0_i32 = arith.constant 0 : i32
    return %arg0, %arg1 : i32, i32
  }
}

</mosaic_0001>

<llo_original>
// kernel: tpu_custom_call.1
$region0: #{tpu_custom_call.1}
  #allocation0 [shape = 'u32[]', space=smem, size = 0x4, offset = 0x4, fixed_abs, tag = 'smem constant byte address 0x4 - core index']
  #allocation1 [shape = 'u32[144,128]{1,0:T(1,128)}', space=vmem, size = 0x12000, scoped, tag = 'internal scratch']
  %s0 = inlined_call_operand.hbm [shape: f32[2,1024], index: 0, kind: input, shape index: {}]
  %s1 = inlined_call_operand.vmem [shape: f32[2,1], index: 1, kind: input, shape index: {}]
  %s2 = inlined_call_operand.hbm [shape: f32[2,1024], index: 2, kind: output, shape index: {}]
  %s3 = sld [smem:[#allocation0]]
  $region22: #{tpu_custom_call.1} parent=0
    _
  %s5 = ssub.s32 1, %s3
  %s6 = scalar_select 0, %s5, %s3
  $region1: #{tpu_custom_call.1} parent=0
    #allocation2 [shape = 'u8[8192]{0}', space=vmem, size = 0x2000, scoped, tag = 'input window, operand 0, single buffered']
    #allocation3 [shape = 's32[1]{0}', space=sflag, size = 0x4, scoped, tag = 'scoped memory for tpu_custom_call.1']
    #allocation4 [shape = 's32[1]{0}', space=sflag, size = 0x4, scoped, tag = 'scoped memory for tpu_custom_call.1']
    #allocation5 [shape = 'u8[8192]{0}', space=vmem, size = 0x2000, scoped, tag = 'output window, operand 0, single buffered']
    %7 = vsyncpa [#allocation3], 0
    %8 = vsyncpa [#allocation4], 0
    // Predicated region
    $region2: #{tpu_custom_call.1} parent=1 // pred_check
      _
    $region3: #{tpu_custom_call.1} parent=1 // pred_check_branch
      %10 = sbr.rel (0) target = $region5
    $region4: #{tpu_custom_call.1} parent=1 // pred_region
      %s12 = ssub.s32 256, 256
      %13 = vsyncadd [#allocation3], %s12
      %s15 = sshll.u32 [#allocation2], 4
      %s16 = int_to_ptr.vmem [resolvable:$true] %s15
      %18 = dma.hbm_to_vmem [thread:$0]  %s0, 256, %s16, [#allocation3]
    $region5: #{tpu_custom_call.1} parent=1 // pred_fallthru
      _
    // Predicated region
    $region6: #{tpu_custom_call.1} parent=1 // pred_check
      _
    $region7: #{tpu_custom_call.1} parent=1 // pred_check_branch
      %20 = sbr.rel (0) target = $region9
    $region8: #{tpu_custom_call.1} parent=1 // pred_region
      _
    $region9: #{tpu_custom_call.1} parent=1 // pred_fallthru
      _
    // Predicated region
    $region10: #{tpu_custom_call.1} parent=1 // pred_check
      _
    $region11: #{tpu_custom_call.1} parent=1 // pred_check_branch
      %22 = sbr.rel (0) target = $region13
    $region12: #{tpu_custom_call.1} parent=1 // pred_region
      %23 = dma.done [#allocation3], 256
    $region13: #{tpu_custom_call.1} parent=1 // pred_fallthru
      _
    %v24 = vld [vmem:[#allocation2] sm:$0xff]
    %v25 = vld [vmem:[#allocation2 + $0x8] sm:$0xff]
    %v26 = vld [vmem:[%s1] sm:$0x3]
    %28 = vset.pattern.permute.xlu0 0
    %29 = vperm.xlu0 %28, %v26
    %v30 = vpop.permute.xlu0 %29
    %v32 = vunpack.c.l.s4 269488144
    %v33 = vunpack.c.0.s8 %v32
    %v34 = vlaneseq
    %v35 = vshrl.u32 %v34, 7
    %v36 = vsub.s32 %v33, %v35
    %v37 = vrot.slane %v30, %v36
    %v39 = vmul.f32 %v24, %v37
    %v40 = vmul.f32 %v25, %v37
    %41 = vst [vmem:[#allocation5] sm:$0xff] %v39
    %42 = vst [vmem:[#allocation5 + $0x8] sm:$0xff] %v40
    // Predicated region
    $region14: #{tpu_custom_call.1} parent=1 // pred_check
      _
    $region15: #{tpu_custom_call.1} parent=1 // pred_check_branch
      %44 = sbr.rel (0) target = $region17
    $region16: #{tpu_custom_call.1} parent=1 // pred_region
      %s46 = ssub.s32 256, 256
      %47 = vsyncadd [#allocation4], %s46
      %s49 = sshll.u32 [#allocation5], 4
      %s50 = int_to_ptr.vmem [resolvable:$true] %s49
      %52 = dma.vmem_to_hbm [thread:$0]  %s50, 256, %s2, [#allocation4]
    $region17: #{tpu_custom_call.1} parent=1 // pred_fallthru
      _
    // Predicated region
    $region18: #{tpu_custom_call.1} parent=1 // pred_check
      _
    $region19: #{tpu_custom_call.1} parent=1 // pred_check_branch
      %54 = sbr.rel (0) target = $region21
    $region20: #{tpu_custom_call.1} parent=1 // pred_region
      %55 = dma.done [#allocation4], 256
    $region21: #{tpu_custom_call.1} parent=1 // pred_fallthru
      _
    %56 = vsyncpa [#allocation3], 1
    %57 = vsyncpa [#allocation4], 1

</llo_original>
